<compile_context>
chip_gen: v5e
topology: v5e:2x2
jax: 0.10.0
libtpu: 0.0.40
codegen_flags: <defaults>
</compile_context>

<pallas_src>
import functools

import jax
import jax.numpy as jnp
from jax.experimental import pallas as pl
from jax.experimental.pallas import tpu as pltpu


def _regression_per_elem(pred_ref, gt_ref, loss_type):
    diff = pred_ref[...] - gt_ref[...]
    if loss_type == "mse":
        return diff * diff
    elif loss_type == "huber":  # SmoothL1 with beta = 1.0
        ad = jnp.abs(diff)
        return jnp.where(ad < 1.0, 0.5 * diff * diff, ad - 0.5)
    else:
        raise ValueError(loss_type)


def _regression_only_kernel(pred_ref, gt_ref, out_ref, *, loss_type):
    # out_ref: SMEM (1,) f32 -> [loss]
    out_ref[0] = jnp.mean(_regression_per_elem(pred_ref, gt_ref, loss_type))


def _regression_entropy_kernel(pred_ref, gt_ref, scores_ref, out_ref, *,
                               loss_type, entropy_loss_weight):
    # out_ref: SMEM (3,) f32 -> [original_loss, entropy_loss (weighted), total loss]
    reg = jnp.mean(_regression_per_elem(pred_ref, gt_ref, loss_type))

    # Term-by-term binary entropy; rows have equal length so
    # mean(dim=1).mean(dim=0).squeeze() == global mean.
    s = scores_ref[...]
    ent_elem = -(s * jnp.log2(s) + (1.0 - s) * jnp.log2(1.0 - s))
    ent = jnp.mean(ent_elem)

    weighted_ent = entropy_loss_weight * ent
    out_ref[0] = reg
    out_ref[1] = weighted_ent
    out_ref[2] = reg + weighted_ent


def counting_regression_loss(pred, answer, scores=None,
                             loss_type="mse", entropy_loss_weight=0.0):
    """Pallas implementation of CountingRegression.forward.

    pred:    (B, 1) float  (net_out['pred'])
    answer:  anything reshapeable to pred.shape (batch['answer'])
    scores:  (B, N) float in (0, 1) (net_out['scores']); only used if entropy_loss_weight != 0
    Returns a dict mirroring the PyTorch module's output.
    """
    pred_f = pred.astype(jnp.float32)
    gt = jnp.asarray(answer).reshape(pred_f.shape).astype(jnp.float32)

    # Lane-dense layout: put the batch dimension on lanes instead of sublanes.
    pred_ld = pred_f.reshape(1, -1)
    gt_ld = gt.reshape(1, -1)

    if entropy_loss_weight != 0.0:
        scores_f = scores.astype(jnp.float32)
        kernel = functools.partial(
            _regression_entropy_kernel,
            loss_type=loss_type,
            entropy_loss_weight=float(entropy_loss_weight),
        )
        out = pl.pallas_call(
            kernel,
            out_shape=jax.ShapeDtypeStruct((3,), jnp.float32),
            in_specs=[
                pl.BlockSpec(memory_space=pltpu.MemorySpace.VMEM),
                pl.BlockSpec(memory_space=pltpu.MemorySpace.VMEM),
                pl.BlockSpec(memory_space=pltpu.MemorySpace.VMEM),
            ],
            out_specs=pl.BlockSpec(memory_space=pltpu.MemorySpace.SMEM),
            cost_estimate=pl.CostEstimate(
                flops=5 * scores_f.size + 4 * pred_ld.size,
                transcendentals=2 * scores_f.size,
                bytes_accessed=4 * (pred_ld.size + gt_ld.size + scores_f.size) + 12,
            ),
        )(pred_ld, gt_ld, scores_f)
        return {
            "original_loss": out[0],
            "entropy_weight": entropy_loss_weight,
            "entropy_loss": out[1],
            "loss": out[2],
        }

    # entropy_loss_weight == 0: no scores DMA, no entropy math, single scalar out.
    kernel = functools.partial(_regression_only_kernel, loss_type=loss_type)
    out = pl.pallas_call(
        kernel,
        out_shape=jax.ShapeDtypeStruct((1,), jnp.float32),
        in_specs=[
            pl.BlockSpec(memory_space=pltpu.MemorySpace.VMEM),
            pl.BlockSpec(memory_space=pltpu.MemorySpace.VMEM),
        ],
        out_specs=pl.BlockSpec(memory_space=pltpu.MemorySpace.SMEM),
        cost_estimate=pl.CostEstimate(
            flops=4 * pred_ld.size,
            transcendentals=0,
            bytes_accessed=4 * (pred_ld.size + gt_ld.size) + 4,
        ),
    )(pred_ld, gt_ld)
    return {"original_loss": out[0], "loss": out[0]}


def _reference(pred, answer, scores, loss_type, entropy_loss_weight):
    pred = pred.astype(jnp.float32)
    gt = jnp.asarray(answer).reshape(pred.shape).astype(jnp.float32)
    d = pred - gt
    if loss_type == "mse":
        loss = jnp.mean(d * d)
    else:
        ad = jnp.abs(d)
        loss = jnp.mean(jnp.where(ad < 1.0, 0.5 * d * d, ad - 0.5))
    if entropy_loss_weight != 0.0:
        s = scores.astype(jnp.float32)
        ent = -s * jnp.log2(s) - (1.0 - s) * jnp.log2(1.0 - s)
        ent = ent.mean(axis=1).mean(axis=0)
        loss = loss + entropy_loss_weight * ent
    return loss


if __name__ == "__main__":
    key = jax.random.PRNGKey(0)
    k1, k2, k3 = jax.random.split(key, 3)

    B, N = 8, 128  # batch, number of per-item scores
    pred = jax.random.uniform(k1, (B, 1), jnp.float32, 0.0, 10.0)
    answer = jax.random.randint(k2, (B,), 0, 10).astype(jnp.float32)  # batch['answer']
    scores = jax.nn.sigmoid(jax.random.normal(k3, (B, N), jnp.float32))

    # MSE + entropy term
    out = counting_regression_loss(pred, answer, scores,
                                   loss_type="mse", entropy_loss_weight=0.5)
    loss = jax.block_until_ready(out["loss"])
    ref = _reference(pred, answer, scores, "mse", 0.5)
    assert jnp.allclose(loss, ref, rtol=1e-5, atol=1e-5), (loss, ref)
    assert jnp.allclose(out["original_loss"],
                        _reference(pred, answer, scores, "mse", 0.0),
                        rtol=1e-5, atol=1e-5)

    # Huber path with entropy disabled (no scores input needed at all)
    out_h = counting_regression_loss(pred, answer,
                                     loss_type="huber", entropy_loss_weight=0.0)
    loss_h = jax.block_until_ready(out_h["loss"])
    ref_h = _reference(pred, answer, scores, "huber", 0.0)
    assert jnp.allclose(loss_h, ref_h, rtol=1e-5, atol=1e-5), (loss_h, ref_h)

    print("KERNEL_OK")
</pallas_src>

<mosaic_0001>
module attributes {stable_mosaic.version = 11 : i64} {
  func.func @_regression_entropy_kernel(%arg0: memref<1x8xf32, #tpu.memory_space<vmem>>, %arg1: memref<1x8xf32, #tpu.memory_space<vmem>>, %arg2: memref<8x128xf32, #tpu.memory_space<vmem>>, %arg3: memref<3xf32, #tpu.memory_space<smem>>) attributes {dimension_semantics = [], scalar_prefetch = 0 : i64, scratch_operands = 0 : i64, tpu.core_type = #tpu.core_type<tc>} {
    %c0 = arith.constant 0 : index
    %c0_0 = arith.constant 0 : index
    %0 = vector.load %arg0[%c0, %c0_0] : memref<1x8xf32, #tpu.memory_space<vmem>>, vector<1x8xf32>
    %c0_1 = arith.constant 0 : index
    %c0_2 = arith.constant 0 : index
    %1 = vector.load %arg1[%c0_1, %c0_2] : memref<1x8xf32, #tpu.memory_space<vmem>>, vector<1x8xf32>
    %2 = arith.subf %0, %1 : vector<1x8xf32>
    %3 = arith.mulf %2, %2 : vector<1x8xf32>
    %4 = vector.shape_cast %3 : vector<1x8xf32> to vector<1x1x8xf32>
    %cst = arith.constant dense<0.000000e+00> : vector<1xf32>
    %5 = vector.multi_reduction <add>, %4, %cst [1, 2] : vector<1x1x8xf32> to vector<1xf32>
    %6 = vector.shape_cast %5 : vector<1xf32> to vector<1x1x1xf32>
    %7 = vector.extract %6[0, 0, 0] : f32 from vector<1x1x1xf32>
    %cst_3 = arith.constant 8.000000e+00 : f32
    %8 = arith.divf %7, %cst_3 : f32
    %c0_4 = arith.constant 0 : index
    %c0_5 = arith.constant 0 : index
    %9 = vector.load %arg2[%c0_4, %c0_5] : memref<8x128xf32, #tpu.memory_space<vmem>>, vector<8x128xf32>
    %10 = math.log %9 : vector<8x128xf32>
    %cst_6 = arith.constant 2.000000e+00 : f32
    %11 = math.log %cst_6 : f32
    %12 = vector.broadcast %11 : f32 to vector<8x128xf32>
    %13 = arith.divf %10, %12 : vector<8x128xf32>
    %14 = arith.mulf %9, %13 : vector<8x128xf32>
    %cst_7 = arith.constant 1.000000e+00 : f32
    %15 = vector.broadcast %cst_7 : f32 to vector<8x128xf32>
    %16 = arith.subf %15, %9 : vector<8x128xf32>
    %cst_8 = arith.constant 1.000000e+00 : f32
    %17 = vector.broadcast %cst_8 : f32 to vector<8x128xf32>
    %18 = arith.subf %17, %9 : vector<8x128xf32>
    %19 = math.log %18 : vector<8x128xf32>
    %cst_9 = arith.constant 2.000000e+00 : f32
    %20 = math.log %cst_9 : f32
    %21 = vector.broadcast %20 : f32 to vector<8x128xf32>
    %22 = arith.divf %19, %21 : vector<8x128xf32>
    %23 = arith.mulf %16, %22 : vector<8x128xf32>
    %24 = arith.addf %14, %23 : vector<8x128xf32>
    %cst_10 = arith.constant 0.000000e+00 : f32
    %25 = vector.broadcast %cst_10 : f32 to vector<8x128xf32>
    %26 = arith.subf %25, %24 : vector<8x128xf32>
    %27 = vector.shape_cast %26 : vector<8x128xf32> to vector<1x8x128xf32>
    %cst_11 = arith.constant dense<0.000000e+00> : vector<1xf32>
    %28 = vector.multi_reduction <add>, %27, %cst_11 [1, 2] : vector<1x8x128xf32> to vector<1xf32>
    %29 = vector.shape_cast %28 : vector<1xf32> to vector<1x1x1xf32>
    %30 = vector.extract %29[0, 0, 0] : f32 from vector<1x1x1xf32>
    %cst_12 = arith.constant 1.024000e+03 : f32
    %31 = arith.divf %30, %cst_12 : f32
    %cst_13 = arith.constant 5.000000e-01 : f32
    %32 = arith.mulf %cst_13, %31 : f32
    %c0_14 = arith.constant 0 : index
    %33 = memref.load %arg3[%c0_14] : memref<3xf32, #tpu.memory_space<smem>>
    memref.store %8, %arg3[%c0_14] : memref<3xf32, #tpu.memory_space<smem>>
    %c1 = arith.constant 1 : index
    %34 = memref.load %arg3[%c1] : memref<3xf32, #tpu.memory_space<smem>>
    memref.store %32, %arg3[%c1] : memref<3xf32, #tpu.memory_space<smem>>
    %35 = arith.addf %8, %32 : f32
    %c2 = arith.constant 2 : index
    %36 = memref.load %arg3[%c2] : memref<3xf32, #tpu.memory_space<smem>>
    memref.store %35, %arg3[%c2] : memref<3xf32, #tpu.memory_space<smem>>
    return
  }
}

</mosaic_0001>

<llo_original>
// kernel: tpu_custom_call.1
$region0: #{tpu_custom_call.1}
  #allocation0 [shape = 'u32[]', space=smem, size = 0x4, offset = 0x4, fixed_abs, tag = 'smem constant byte address 0x4 - core index']
  #allocation1 [shape = 'u32[72,128]{1,0:T(1,128)}', space=vmem, size = 0x9000, scoped, tag = 'internal scratch']
  %s0 = inlined_call_operand.hbm [shape: f32[1,8], index: 0, kind: input, shape index: {}]
  %s1 = inlined_call_operand.hbm [shape: f32[1,8], index: 1, kind: input, shape index: {}]
  %s2 = inlined_call_operand.hbm [shape: f32[8,128], index: 2, kind: input, shape index: {}]
  %s3 = inlined_call_operand.hbm [shape: f32[3], index: 3, kind: output, shape index: {}]
  %s4 = sld [smem:[#allocation0]]
  $region34: #{tpu_custom_call.1} parent=0
    _
  %s6 = ssub.s32 1, %s4
  %s7 = scalar_select 0, %s6, %s4
  $region1: #{tpu_custom_call.1} parent=0
    #allocation2 [shape = 'u8[512]{0}', space=vmem, size = 0x400, scoped, tag = 'input window, operand 0, single buffered']
    #allocation3 [shape = 's32[1]{0}', space=sflag, size = 0x4, scoped, tag = 'scoped memory for tpu_custom_call.1']
    #allocation4 [shape = 's32[1]{0}', space=sflag, size = 0x4, scoped, tag = 'scoped memory for tpu_custom_call.1']
    #allocation5 [shape = 'u8[512]{0}', space=vmem, size = 0x400, scoped, tag = 'input window, operand 1, single buffered']
    #allocation6 [shape = 's32[1]{0}', space=sflag, size = 0x4, scoped, tag = 'scoped memory for tpu_custom_call.1']
    #allocation7 [shape = 'u8[4096]{0}', space=vmem, size = 0x1000, scoped, tag = 'input window, operand 2, single buffered']
    #allocation8 [shape = 'u8[512]{0}', space=smem, size = 0x200, scoped, tag = 'output window, operand 0, single buffered']
    %8 = vsyncpa [#allocation3], 0
    %9 = vsyncpa [#allocation6], 0
    %10 = vsyncpa [#allocation4], 0
    // Predicated region
    $region2: #{tpu_custom_call.1} parent=1 // pred_check
      _
    $region3: #{tpu_custom_call.1} parent=1 // pred_check_branch
      %12 = sbr.rel (0) target = $region5
    $region4: #{tpu_custom_call.1} parent=1 // pred_region
      %14 = vsyncadd [#allocation3], 0
      %s16 = sshll.u32 %s0, 4
      %s17 = int_to_ptr.hbm [resolvable:$true] %s16
      %s18 = sshll.u32 [#allocation2], 4
      %s19 = int_to_ptr.vmem [resolvable:$true] %s18
      %21 = dma.hbm_to_vmem [thread:$0]  %s17, 16, %s19, [#allocation3]
    $region5: #{tpu_custom_call.1} parent=1 // pred_fallthru
      _
    // Predicated region
    $region6: #{tpu_custom_call.1} parent=1 // pred_check
      _
    $region7: #{tpu_custom_call.1} parent=1 // pred_check_branch
      %23 = sbr.rel (0) target = $region9
    $region8: #{tpu_custom_call.1} parent=1 // pred_region
      %25 = vsyncadd [#allocation6], 0
      %s27 = sshll.u32 %s1, 4
      %s28 = int_to_ptr.hbm [resolvable:$true] %s27
      %s29 = sshll.u32 [#allocation5], 4
      %s30 = int_to_ptr.vmem [resolvable:$true] %s29
      %32 = dma.hbm_to_vmem [thread:$0]  %s28, 16, %s30, [#allocation6]
    $region9: #{tpu_custom_call.1} parent=1 // pred_fallthru
      _
    // Predicated region
    $region10: #{tpu_custom_call.1} parent=1 // pred_check
      _
    $region11: #{tpu_custom_call.1} parent=1 // pred_check_branch
      %34 = sbr.rel (0) target = $region13
    $region12: #{tpu_custom_call.1} parent=1 // pred_region
      %36 = vsyncadd [#allocation6], 0
      %s38 = sshll.u32 %s2, 4
      %s39 = int_to_ptr.hbm [resolvable:$true] %s38
      %s40 = sshll.u32 [#allocation7], 4
      %s41 = int_to_ptr.vmem [resolvable:$true] %s40
      %43 = dma.hbm_to_vmem [thread:$0]  %s39, 128, %s41, [#allocation6]
    $region13: #{tpu_custom_call.1} parent=1 // pred_fallthru
      _
    // Predicated region
    $region14: #{tpu_custom_call.1} parent=1 // pred_check
      _
    $region15: #{tpu_custom_call.1} parent=1 // pred_check_branch
      %45 = sbr.rel (0) target = $region17
    $region16: #{tpu_custom_call.1} parent=1 // pred_region
      %47 = dma.done [#allocation3], 16
    $region17: #{tpu_custom_call.1} parent=1 // pred_fallthru
      _
    // Predicated region
    $region18: #{tpu_custom_call.1} parent=1 // pred_check
      _
    $region19: #{tpu_custom_call.1} parent=1 // pred_check_branch
      %49 = sbr.rel (0) target = $region21
    $region20: #{tpu_custom_call.1} parent=1 // pred_region
      %51 = dma.done [#allocation6], 16
    $region21: #{tpu_custom_call.1} parent=1 // pred_fallthru
      _
    // Predicated region
    $region22: #{tpu_custom_call.1} parent=1 // pred_check
      _
    $region23: #{tpu_custom_call.1} parent=1 // pred_check_branch
      %53 = sbr.rel (0) target = $region25
    $region24: #{tpu_custom_call.1} parent=1 // pred_region
      %55 = dma.done [#allocation6], 128
    $region25: #{tpu_custom_call.1} parent=1 // pred_fallthru
      _
    %v56 = vld [vmem:[#allocation2] sm:$0x1]
    %v57 = vld [vmem:[#allocation5] sm:$0x1]
    %v58 = vsub.f32 %v56, %v57
    %v59 = vmul.f32 %v58, %v58
    %vm60 = vcmask 57344
    %v61 = vsel %vm60, %v59, 0.0
    %62 = vadd.xlane.f32.xlu0 %v61
    %v63 = vpop.xlane.xlu0 %62
    %v64 = vrot.slane %v63, 4
    %v65 = vadd.f32 %v63, %v64
    %v66 = vrot.slane %v65, 2
    %v67 = vadd.f32 %v65, %v66
    %v68 = vrot.slane %v67, 1
    %v69 = vadd.f32 %v67, %v68
    %s70 = vtos %v69
    %v71 = vrcp.pop 8.0
    %v72 = vmul.f32 8.0, %v71
    %v73 = vsub.f32 1.0, %v72
    %v74 = vmul.f32 %v71, %v73
    %v75 = vadd.f32 %v71, %v74
    %vm76 = vweird.f32 %v71
    %v77 = vsel %vm76, %v71, %v75
    %s78 = vtos %v77
    %s79 = smul.f32 %s70, %s78
    %v80 = vld [vmem:[#allocation7] sm:$0xff]
    %v81 = vlog2.pop %v80
    %v82 = vmul.f32 %v81, 0.6931472
    %v83 = vrcp.pop 0.6931472
    %v84 = vmul.f32 0.6931472, %v83
    %v85 = vsub.f32 1.0, %v84
    %v86 = vmul.f32 %v83, %v85
    %v87 = vadd.f32 %v83, %v86
    %vm88 = vweird.f32 %v83
    %v89 = vsel %vm88, %v83, %v87
    %v90 = vmul.f32 %v82, %v89
    %v91 = vmul.f32 %v80, %v90
    %v92 = vsub.f32 1.0, %v80
    %v93 = vlog2.pop %v92
    %v94 = vmul.f32 %v93, 0.6931472
    %v95 = vmul.f32 %v94, %v89
    %v96 = vmul.f32 %v92, %v95
    %v97 = vadd.f32 %v91, %v96
    %v98 = vsub.f32 0.0, %v97
    %99 = vadd.xlane.f32.xlu0 %v98
    %v100 = vpop.xlane.xlu0 %99
    %v101 = vrot.slane %v100, 4
    %v102 = vadd.f32 %v100, %v101
    %v103 = vrot.slane %v102, 2
    %v104 = vadd.f32 %v102, %v103
    %v105 = vrot.slane %v104, 1
    %v106 = vadd.f32 %v104, %v105
    %s107 = vtos %v106
    %v108 = vrcp.pop 1024.0
    %v109 = vmul.f32 1024.0, %v108
    %v110 = vsub.f32 1.0, %v109
    %v111 = vmul.f32 %v108, %v110
    %v112 = vadd.f32 %v108, %v111
    %vm113 = vweird.f32 %v108
    %v114 = vsel %vm113, %v108, %v112
    %s115 = vtos %v114
    %s116 = smul.f32 %s107, %s115
    %s117 = smul.f32 %s116, 0.5
    %s118 = scalar_lea.smem [#allocation8], 0
    %119 = sst [smem:[%s118]] %s79
    %s120 = scalar_lea.smem [#allocation8], 1
    %121 = sst [smem:[%s120]] %s117
    %s122 = sadd.f32 %s79, %s117
    %s123 = scalar_lea.smem [#allocation8], 2
    %124 = sst [smem:[%s123]] %s122
    // Predicated region
    $region26: #{tpu_custom_call.1} parent=1 // pred_check
      _
    $region27: #{tpu_custom_call.1} parent=1 // pred_check_branch
      %126 = sbr.rel (0) target = $region29
    $region28: #{tpu_custom_call.1} parent=1 // pred_region
      %128 = vsyncadd [#allocation4], 0
      %s130 = sshll.u32 %s3, 4
      %s131 = int_to_ptr.hbm [resolvable:$true] %s130
      %133 = dma.smem_to_hbm [#allocation8], 16, %s131, [#allocation4]
    $region29: #{tpu_custom_call.1} parent=1 // pred_fallthru
      _
    // Predicated region
    $region30: #{tpu_custom_call.1} parent=1 // pred_check
      _
    $region31: #{tpu_custom_call.1} parent=1 // pred_check_branch
      %135 = sbr.rel (0) target = $region33
    $region32: #{tpu_custom_call.1} parent=1 // pred_region
      %137 = dma.done [#allocation4], 16
    $region33: #{tpu_custom_call.1} parent=1 // pred_fallthru
      _
    %138 = sfence
    %139 = vsyncpa [#allocation3], 1
    %140 = vsyncpa [#allocation6], 1
    %141 = vsyncpa [#allocation4], 1

</llo_original>
